<compile_context>
chip_gen: v7x
topology: tpu7x:2x2x1
jax: 0.10.0
libtpu: 0.0.40
codegen_flags: <defaults>
</compile_context>

<pallas_src>
import jax
import jax.numpy as jnp
from jax import lax
from jax.experimental import pallas as pl
from jax.experimental.pallas import tpu as pltpu

_WAVE = 8  # rows per DMA wave in the HBM-gather fallback


def _sublane_multiple(dtype) -> int:
    """Minimum second-minor tile multiple for a dtype (32-bit: 8, 16-bit: 16, 8-bit: 32)."""
    return {4: 8, 2: 16, 1: 32}[jnp.dtype(dtype).itemsize]


def _make_resident_kernel(seq_len: int, seq_tile: int, out_dtype):
    """Word table resident in VMEM: per-row dynamic gather fused with the position add."""

    def kernel(ids_ref, word_ref, pos_ref, out_ref):
        # ids_ref : SMEM (B*S,) int32    (scalar prefetch)
        # word_ref: VMEM (V, D)          (whole table, constant index_map -> fetched once)
        # pos_ref : VMEM (seq_tile, D)   (position slab for this tile; reused across batch)
        # out_ref : VMEM (seq_tile, D)
        s = pl.program_id(0)
        b = pl.program_id(1)
        base = b * seq_len + s * seq_tile

        def one_row(r):
            tok = ids_ref[base + r]
            row = word_ref[pl.ds(tok, 1), :].astype(out_dtype)
            out_ref[pl.ds(r, 1), :] = row + pos_ref[pl.ds(r, 1), :].astype(out_dtype)

        if seq_tile <= 64:
            # Small tile: static unroll (compiler sees static row indices).
            for r in range(seq_tile):
                one_row(r)
        else:
            # Large tile: bounded code size, scheduler-visible loop.
            def body(r, carry):
                one_row(r)
                return carry

            lax.fori_loop(0, seq_tile, body, 0, unroll=8)

    return kernel


def _make_hbm_gather_kernel(seq_len: int, seq_tile: int, out_dtype, direct_to_out: bool,
                            wave: int = _WAVE):
    """Large-vocab fallback: wave-chunked, cross-wave-pipelined per-row HBM DMA gather."""
    num_waves = seq_tile // wave

    def _gather(ids_ref, word_hbm, dst, sem, base):
        def issue_wave(w, slot):
            for j in range(wave):
                r = w * wave + j
                tok = ids_ref[base + r]
                pltpu.make_async_copy(
                    word_hbm.at[pl.ds(tok, 1), :],
                    dst.at[pl.ds(r, 1), :],
                    sem.at[slot, j],
                ).start()

        def wait_wave(w, slot):
            for j in range(wave):
                r = w * wave + j
                # Descriptor only defines the byte count / sem to wait on.
                pltpu.make_async_copy(
                    word_hbm.at[pl.ds(0, 1), :],
                    dst.at[pl.ds(r, 1), :],
                    sem.at[slot, j],
                ).wait()

        def wave_body(w, carry):
            issue_wave(w, w % 2)          # issue wave w ...

            @pl.when(w >= 1)
            def _():
                wait_wave(w - 1, (w - 1) % 2)   # ... while wave w-1 is still in flight
            return carry

        lax.fori_loop(0, num_waves, wave_body, 0)
        wait_wave(num_waves - 1, (num_waves - 1) % 2)

    if direct_to_out:
        # Gather rows straight into the output tile; fused in-place position add.
        def kernel(ids_ref, word_hbm, pos_ref, out_ref, sem):
            s = pl.program_id(0)
            b = pl.program_id(1)
            base = b * seq_len + s * seq_tile
            _gather(ids_ref, word_hbm, out_ref, sem, base)
            out_ref[...] = out_ref[...] + pos_ref[...].astype(out_dtype)
    else:
        def kernel(ids_ref, word_hbm, pos_ref, out_ref, tok_buf, sem):
            s = pl.program_id(0)
            b = pl.program_id(1)
            base = b * seq_len + s * seq_tile
            _gather(ids_ref, word_hbm, tok_buf, sem, base)
            out_ref[...] = tok_buf[...].astype(out_dtype) + pos_ref[...].astype(out_dtype)

    return kernel


def embeddings_forward(
    input_ids,
    word_emb,
    pos_emb,
    *,
    dropout_prob: float = 0.0,
    deterministic: bool = True,
    seq_tile: int | None = None,
    resident_table_max_bytes: int = 24 * 1024 * 1024,  # safe on v7x (64 MiB VMEM)
):
    """Token embedding lookup + learned position embedding (+ eval-mode dropout)."""
    B, S = input_ids.shape
    V, D = word_emb.shape
    max_seq_len = pos_emb.shape[0]
    assert S <= max_seq_len, "sequence longer than position table"

    out_dtype = jnp.promote_types(word_emb.dtype, pos_emb.dtype)
    sub_mult = max(_sublane_multiple(out_dtype),
                   _sublane_multiple(pos_emb.dtype),
                   _sublane_multiple(word_emb.dtype))

    if seq_tile is None:
        # Collapse small problems into one tile per sequence (fewer ~600-cycle steps);
        # cap tile rows to bound VMEM for very long sequences.
        seq_tile = S if (S % sub_mult == 0 and S <= 512) else min(512, S)
    # TODO(synk): pad/handle ragged S instead of requiring divisibility.
    assert S % seq_tile == 0, f"seq_len {S} must be divisible by seq_tile {seq_tile}"
    assert seq_tile % sub_mult == 0, (
        f"seq_tile must be a multiple of {sub_mult} for dtype packing (got {seq_tile})")
    num_seq_tiles = S // seq_tile

    # Clamp out-of-range ids so a bad id cannot produce an out-of-bounds gather.
    # (nn.Embedding would raise; clamping is the graceful in-kernel equivalent. No padding_idx.)
    ids_flat = jnp.clip(input_ids.reshape(-1).astype(jnp.int32), 0, V - 1)
    pos_used = pos_emb[:S]  # only the first S position rows are used

    # ------------------------------------------------------------------ path choice
    table_bytes = V * D * jnp.dtype(word_emb.dtype).itemsize
    resident = table_bytes <= resident_table_max_bytes
    direct_to_out = jnp.dtype(word_emb.dtype) == jnp.dtype(out_dtype)

    pos_bytes = seq_tile * D * jnp.dtype(pos_emb.dtype).itemsize
    out_bytes = seq_tile * D * jnp.dtype(out_dtype).itemsize
    if resident:
        word_buf_bytes = table_bytes
    else:
        word_buf_bytes = 0 if direct_to_out else seq_tile * D * jnp.dtype(word_emb.dtype).itemsize
    needed = word_buf_bytes + 2 * pos_bytes + 2 * out_bytes
    # Floor at the 32 MiB default scoped limit, cap below v7x's 64 MiB physical VMEM.
    vmem_limit = int(min(max(needed + (4 << 20), 32 << 20), 56 << 20))

    if resident:
        kernel = _make_resident_kernel(S, seq_tile, out_dtype)
        word_spec = pl.BlockSpec((V, D), lambda s, b, ids: (0, 0))  # fetched once, stays resident
        scratch_shapes = []
    else:
        assert seq_tile % _WAVE == 0
        kernel = _make_hbm_gather_kernel(S, seq_tile, out_dtype, direct_to_out)
        word_spec = pl.BlockSpec(memory_space=pl.ANY)  # raw HBM ref, gathered manually
        scratch_shapes = (
            ([] if direct_to_out else [pltpu.VMEM((seq_tile, D), word_emb.dtype)])
            + [pltpu.SemaphoreType.DMA((2, _WAVE))]     # small double-buffered sem ring
        )

    out = pl.pallas_call(
        kernel,
        out_shape=jax.ShapeDtypeStruct((B * S, D), out_dtype),
        grid_spec=pltpu.PrefetchScalarGridSpec(
            num_scalar_prefetch=1,           # ids_flat -> SMEM
            grid=(num_seq_tiles, B),         # batch innermost -> pos slab reused across batch
            in_specs=[
                word_spec,
                pl.BlockSpec((seq_tile, D), lambda s, b, ids: (s, 0)),
            ],
            out_specs=pl.BlockSpec(
                (seq_tile, D), lambda s, b, ids: (b * num_seq_tiles + s, 0)
            ),
            scratch_shapes=scratch_shapes,
        ),
        compiler_params=pltpu.CompilerParams(
            dimension_semantics=("parallel", "parallel"),  # even 2-TC split on v7x
            vmem_limit_bytes=vmem_limit,
        ),
    )(ids_flat, word_emb, pos_used)

    X = out.reshape(B, S, D)

    if (not deterministic) and dropout_prob > 0.0:
        # TODO(synk): training-mode stochastic dropout (pltpu.prng_seed / prng_random_bits).
        raise NotImplementedError(
            "training-mode dropout not implemented; eval mode (identity) only"
        )
    return X


if __name__ == "__main__":
    key = jax.random.PRNGKey(0)
    k_word, k_pos, k_ids = jax.random.split(key, 3)

    config = dict(
        vocab_size=64,
        embedding_dim=128,
        transformer_dim=128,
        max_seq_len=16,
        dropout_prob=0.1,
    )
    assert config["embedding_dim"] == config["transformer_dim"]

    B, S, D = 2, 16, config["embedding_dim"]

    # Deterministic parameter init matching torch.nn.init.normal_(std=0.02).
    word_emb = 0.02 * jax.random.normal(
        k_word, (config["vocab_size"], D), dtype=jnp.float32
    )
    pos_emb = 0.02 * jax.random.normal(
        k_pos, (config["max_seq_len"], D), dtype=jnp.float32
    )

    input_ids = jax.random.randint(
        k_ids, (B, S), 0, config["vocab_size"], dtype=jnp.int32
    )

    # Demo uses the VMEM-resident table fast path (64 x 128 f32 table = 32 KiB) and a
    # collapsed grid (seq_tile = S = 16 -> one grid step per batch element).
    X = embeddings_forward(
        input_ids,
        word_emb,
        pos_emb,
        dropout_prob=config["dropout_prob"],
        deterministic=True,   # eval mode: dropout is identity, as in module.eval()
    )
    X = jax.block_until_ready(X)

    # Pure-JAX reference (word lookup + position lookup, eval-mode dropout).
    ref = word_emb[input_ids] + pos_emb[:S][None, :, :]
    assert X.shape == (B, S, D)
    assert jnp.allclose(X, ref, atol=1e-6), "mismatch vs reference"

    print("KERNEL_OK")
</pallas_src>

<mosaic_0001>
module attributes {stable_mosaic.version = 11 : i64} {
  func.func @kernel(%arg0: i32, %arg1: i32, %arg2: memref<32xi32, #tpu.memory_space<smem>>, %arg3: memref<64x128xf32, #tpu.memory_space<vmem>>, %arg4: memref<16x128xf32, #tpu.memory_space<vmem>>, %arg5: memref<16x128xf32, #tpu.memory_space<vmem>>) attributes {dimension_semantics = [#tpu.dimension_semantics<parallel>, #tpu.dimension_semantics<parallel>], iteration_bounds = array<i64: 1, 2>, scalar_prefetch = 1 : i64, scratch_operands = 0 : i64, tpu.core_type = #tpu.core_type<tc>, window_params = [{pipeline_mode = #tpu.pipeline_mode<synchronous>, transform_indices = @transform_0, window_bounds = array<i64: 64, 128>}, {transform_indices = @transform_1, window_bounds = array<i64: 16, 128>}, {transform_indices = @transform_2, window_bounds = array<i64: 16, 128>}]} {
    %c16_i32 = arith.constant 16 : i32
    %0 = arith.muli %arg1, %c16_i32 : i32
    %c16_i32_0 = arith.constant 16 : i32
    %1 = arith.muli %arg0, %c16_i32_0 : i32
    %2 = arith.addi %0, %1 : i32
    %c0_i32 = arith.constant 0 : i32
    %3 = arith.addi %2, %c0_i32 : i32
    %4 = arith.index_cast %3 : i32 to index
    %5 = memref.load %arg2[%4] : memref<32xi32, #tpu.memory_space<smem>>
    %6 = arith.index_cast %5 : i32 to index
    %c0 = arith.constant 0 : index
    %7 = vector.load %arg3[%6, %c0] : memref<64x128xf32, #tpu.memory_space<vmem>>, vector<1x128xf32>
    %c0_1 = arith.constant 0 : index
    %c0_2 = arith.constant 0 : index
    %8 = vector.load %arg4[%c0_1, %c0_2] : memref<16x128xf32, #tpu.memory_space<vmem>>, vector<1x128xf32>
    %9 = arith.addf %7, %8 : vector<1x128xf32>
    %c0_3 = arith.constant 0 : index
    %c0_4 = arith.constant 0 : index
    %10 = vector.load %arg5[%c0_3, %c0_4] : memref<16x128xf32, #tpu.memory_space<vmem>>, vector<1x128xf32>
    tpu.vector_store %arg5[%c0_3, %c0_4], %9 {strides = array<i32>} : memref<16x128xf32, #tpu.memory_space<vmem>>, vector<1x128xf32>,
    %c1_i32 = arith.constant 1 : i32
    %11 = arith.addi %2, %c1_i32 : i32
    %12 = arith.index_cast %11 : i32 to index
    %13 = memref.load %arg2[%12] : memref<32xi32, #tpu.memory_space<smem>>
    %14 = arith.index_cast %13 : i32 to index
    %c0_5 = arith.constant 0 : index
    %15 = vector.load %arg3[%14, %c0_5] : memref<64x128xf32, #tpu.memory_space<vmem>>, vector<1x128xf32>
    %c1 = arith.constant 1 : index
    %c0_6 = arith.constant 0 : index
    %16 = vector.load %arg4[%c1, %c0_6] : memref<16x128xf32, #tpu.memory_space<vmem>>, vector<1x128xf32>
    %17 = arith.addf %15, %16 : vector<1x128xf32>
    %c1_7 = arith.constant 1 : index
    %c0_8 = arith.constant 0 : index
    %18 = vector.load %arg5[%c1_7, %c0_8] : memref<16x128xf32, #tpu.memory_space<vmem>>, vector<1x128xf32>
    tpu.vector_store %arg5[%c1_7, %c0_8], %17 {strides = array<i32>} : memref<16x128xf32, #tpu.memory_space<vmem>>, vector<1x128xf32>,
    %c2_i32 = arith.constant 2 : i32
    %19 = arith.addi %2, %c2_i32 : i32
    %20 = arith.index_cast %19 : i32 to index
    %21 = memref.load %arg2[%20] : memref<32xi32, #tpu.memory_space<smem>>
    %22 = arith.index_cast %21 : i32 to index
    %c0_9 = arith.constant 0 : index
    %23 = vector.load %arg3[%22, %c0_9] : memref<64x128xf32, #tpu.memory_space<vmem>>, vector<1x128xf32>
    %c2 = arith.constant 2 : index
    %c0_10 = arith.constant 0 : index
    %24 = vector.load %arg4[%c2, %c0_10] : memref<16x128xf32, #tpu.memory_space<vmem>>, vector<1x128xf32>
    %25 = arith.addf %23, %24 : vector<1x128xf32>
    %c2_11 = arith.constant 2 : index
    %c0_12 = arith.constant 0 : index
    %26 = vector.load %arg5[%c2_11, %c0_12] : memref<16x128xf32, #tpu.memory_space<vmem>>, vector<1x128xf32>
    tpu.vector_store %arg5[%c2_11, %c0_12], %25 {strides = array<i32>} : memref<16x128xf32, #tpu.memory_space<vmem>>, vector<1x128xf32>,
    %c3_i32 = arith.constant 3 : i32
    %27 = arith.addi %2, %c3_i32 : i32
    %28 = arith.index_cast %27 : i32 to index
    %29 = memref.load %arg2[%28] : memref<32xi32, #tpu.memory_space<smem>>
    %30 = arith.index_cast %29 : i32 to index
    %c0_13 = arith.constant 0 : index
    %31 = vector.load %arg3[%30, %c0_13] : memref<64x128xf32, #tpu.memory_space<vmem>>, vector<1x128xf32>
    %c3 = arith.constant 3 : index
    %c0_14 = arith.constant 0 : index
    %32 = vector.load %arg4[%c3, %c0_14] : memref<16x128xf32, #tpu.memory_space<vmem>>, vector<1x128xf32>
    %33 = arith.addf %31, %32 : vector<1x128xf32>
    %c3_15 = arith.constant 3 : index
    %c0_16 = arith.constant 0 : index
    %34 = vector.load %arg5[%c3_15, %c0_16] : memref<16x128xf32, #tpu.memory_space<vmem>>, vector<1x128xf32>
    tpu.vector_store %arg5[%c3_15, %c0_16], %33 {strides = array<i32>} : memref<16x128xf32, #tpu.memory_space<vmem>>, vector<1x128xf32>,
    %c4_i32 = arith.constant 4 : i32
    %35 = arith.addi %2, %c4_i32 : i32
    %36 = arith.index_cast %35 : i32 to index
    %37 = memref.load %arg2[%36] : memref<32xi32, #tpu.memory_space<smem>>
    %38 = arith.index_cast %37 : i32 to index
    %c0_17 = arith.constant 0 : index
    %39 = vector.load %arg3[%38, %c0_17] : memref<64x128xf32, #tpu.memory_space<vmem>>, vector<1x128xf32>
    %c4 = arith.constant 4 : index
    %c0_18 = arith.constant 0 : index
    %40 = vector.load %arg4[%c4, %c0_18] : memref<16x128xf32, #tpu.memory_space<vmem>>, vector<1x128xf32>
    %41 = arith.addf %39, %40 : vector<1x128xf32>
    %c4_19 = arith.constant 4 : index
    %c0_20 = arith.constant 0 : index
    %42 = vector.load %arg5[%c4_19, %c0_20] : memref<16x128xf32, #tpu.memory_space<vmem>>, vector<1x128xf32>
    tpu.vector_store %arg5[%c4_19, %c0_20], %41 {strides = array<i32>} : memref<16x128xf32, #tpu.memory_space<vmem>>, vector<1x128xf32>,
    %c5_i32 = arith.constant 5 : i32
    %43 = arith.addi %2, %c5_i32 : i32
    %44 = arith.index_cast %43 : i32 to index
    %45 = memref.load %arg2[%44] : memref<32xi32, #tpu.memory_space<smem>>
    %46 = arith.index_cast %45 : i32 to index
    %c0_21 = arith.constant 0 : index
    %47 = vector.load %arg3[%46, %c0_21] : memref<64x128xf32, #tpu.memory_space<vmem>>, vector<1x128xf32>
    %c5 = arith.constant 5 : index
    %c0_22 = arith.constant 0 : index
    %48 = vector.load %arg4[%c5, %c0_22] : memref<16x128xf32, #tpu.memory_space<vmem>>, vector<1x128xf32>
    %49 = arith.addf %47, %48 : vector<1x128xf32>
    %c5_23 = arith.constant 5 : index
    %c0_24 = arith.constant 0 : index
    %50 = vector.load %arg5[%c5_23, %c0_24] : memref<16x128xf32, #tpu.memory_space<vmem>>, vector<1x128xf32>
    tpu.vector_store %arg5[%c5_23, %c0_24], %49 {strides = array<i32>} : memref<16x128xf32, #tpu.memory_space<vmem>>, vector<1x128xf32>,
    %c6_i32 = arith.constant 6 : i32
    %51 = arith.addi %2, %c6_i32 : i32
    %52 = arith.index_cast %51 : i32 to index
    %53 = memref.load %arg2[%52] : memref<32xi32, #tpu.memory_space<smem>>
    %54 = arith.index_cast %53 : i32 to index
    %c0_25 = arith.constant 0 : index
    %55 = vector.load %arg3[%54, %c0_25] : memref<64x128xf32, #tpu.memory_space<vmem>>, vector<1x128xf32>
    %c6 = arith.constant 6 : index
    %c0_26 = arith.constant 0 : index
    %56 = vector.load %arg4[%c6, %c0_26] : memref<16x128xf32, #tpu.memory_space<vmem>>, vector<1x128xf32>
    %57 = arith.addf %55, %56 : vector<1x128xf32>
    %c6_27 = arith.constant 6 : index
    %c0_28 = arith.constant 0 : index
    %58 = vector.load %arg5[%c6_27, %c0_28] : memref<16x128xf32, #tpu.memory_space<vmem>>, vector<1x128xf32>
    tpu.vector_store %arg5[%c6_27, %c0_28], %57 {strides = array<i32>} : memref<16x128xf32, #tpu.memory_space<vmem>>, vector<1x128xf32>,
    %c7_i32 = arith.constant 7 : i32
    %59 = arith.addi %2, %c7_i32 : i32
    %60 = arith.index_cast %59 : i32 to index
    %61 = memref.load %arg2[%60] : memref<32xi32, #tpu.memory_space<smem>>
    %62 = arith.index_cast %61 : i32 to index
    %c0_29 = arith.constant 0 : index
    %63 = vector.load %arg3[%62, %c0_29] : memref<64x128xf32, #tpu.memory_space<vmem>>, vector<1x128xf32>
    %c7 = arith.constant 7 : index
    %c0_30 = arith.constant 0 : index
    %64 = vector.load %arg4[%c7, %c0_30] : memref<16x128xf32, #tpu.memory_space<vmem>>, vector<1x128xf32>
    %65 = arith.addf %63, %64 : vector<1x128xf32>
    %c7_31 = arith.constant 7 : index
    %c0_32 = arith.constant 0 : index
    %66 = vector.load %arg5[%c7_31, %c0_32] : memref<16x128xf32, #tpu.memory_space<vmem>>, vector<1x128xf32>
    tpu.vector_store %arg5[%c7_31, %c0_32], %65 {strides = array<i32>} : memref<16x128xf32, #tpu.memory_space<vmem>>, vector<1x128xf32>,
    %c8_i32 = arith.constant 8 : i32
    %67 = arith.addi %2, %c8_i32 : i32
    %68 = arith.index_cast %67 : i32 to index
    %69 = memref.load %arg2[%68] : memref<32xi32, #tpu.memory_space<smem>>
    %70 = arith.index_cast %69 : i32 to index
    %c0_33 = arith.constant 0 : index
    %71 = vector.load %arg3[%70, %c0_33] : memref<64x128xf32, #tpu.memory_space<vmem>>, vector<1x128xf32>
    %c8 = arith.constant 8 : index
    %c0_34 = arith.constant 0 : index
    %72 = vector.load %arg4[%c8, %c0_34] : memref<16x128xf32, #tpu.memory_space<vmem>>, vector<1x128xf32>
    %73 = arith.addf %71, %72 : vector<1x128xf32>
    %c8_35 = arith.constant 8 : index
    %c0_36 = arith.constant 0 : index
    %74 = vector.load %arg5[%c8_35, %c0_36] : memref<16x128xf32, #tpu.memory_space<vmem>>, vector<1x128xf32>
    tpu.vector_store %arg5[%c8_35, %c0_36], %73 {strides = array<i32>} : memref<16x128xf32, #tpu.memory_space<vmem>>, vector<1x128xf32>,
    %c9_i32 = arith.constant 9 : i32
    %75 = arith.addi %2, %c9_i32 : i32
    %76 = arith.index_cast %75 : i32 to index
    %77 = memref.load %arg2[%76] : memref<32xi32, #tpu.memory_space<smem>>
    %78 = arith.index_cast %77 : i32 to index
    %c0_37 = arith.constant 0 : index
    %79 = vector.load %arg3[%78, %c0_37] : memref<64x128xf32, #tpu.memory_space<vmem>>, vector<1x128xf32>
    %c9 = arith.constant 9 : index
    %c0_38 = arith.constant 0 : index
    %80 = vector.load %arg4[%c9, %c0_38] : memref<16x128xf32, #tpu.memory_space<vmem>>, vector<1x128xf32>
    %81 = arith.addf %79, %80 : vector<1x128xf32>
    %c9_39 = arith.constant 9 : index
    %c0_40 = arith.constant 0 : index
    %82 = vector.load %arg5[%c9_39, %c0_40] : memref<16x128xf32, #tpu.memory_space<vmem>>, vector<1x128xf32>
    tpu.vector_store %arg5[%c9_39, %c0_40], %81 {strides = array<i32>} : memref<16x128xf32, #tpu.memory_space<vmem>>, vector<1x128xf32>,
    %c10_i32 = arith.constant 10 : i32
    %83 = arith.addi %2, %c10_i32 : i32
    %84 = arith.index_cast %83 : i32 to index
    %85 = memref.load %arg2[%84] : memref<32xi32, #tpu.memory_space<smem>>
    %86 = arith.index_cast %85 : i32 to index
    %c0_41 = arith.constant 0 : index
    %87 = vector.load %arg3[%86, %c0_41] : memref<64x128xf32, #tpu.memory_space<vmem>>, vector<1x128xf32>
    %c10 = arith.constant 10 : index
    %c0_42 = arith.constant 0 : index
    %88 = vector.load %arg4[%c10, %c0_42] : memref<16x128xf32, #tpu.memory_space<vmem>>, vector<1x128xf32>
    %89 = arith.addf %87, %88 : vector<1x128xf32>
    %c10_43 = arith.constant 10 : index
    %c0_44 = arith.constant 0 : index
    %90 = vector.load %arg5[%c10_43, %c0_44] : memref<16x128xf32, #tpu.memory_space<vmem>>, vector<1x128xf32>
    tpu.vector_store %arg5[%c10_43, %c0_44], %89 {strides = array<i32>} : memref<16x128xf32, #tpu.memory_space<vmem>>, vector<1x128xf32>,
    %c11_i32 = arith.constant 11 : i32
    %91 = arith.addi %2, %c11_i32 : i32
    %92 = arith.index_cast %91 : i32 to index
    %93 = memref.load %arg2[%92] : memref<32xi32, #tpu.memory_space<smem>>
    %94 = arith.index_cast %93 : i32 to index
    %c0_45 = arith.constant 0 : index
    %95 = vector.load %arg3[%94, %c0_45] : memref<64x128xf32, #tpu.memory_space<vmem>>, vector<1x128xf32>
    %c11 = arith.constant 11 : index
    %c0_46 = arith.constant 0 : index
    %96 = vector.load %arg4[%c11, %c0_46] : memref<16x128xf32, #tpu.memory_space<vmem>>, vector<1x128xf32>
    %97 = arith.addf %95, %96 : vector<1x128xf32>
    %c11_47 = arith.constant 11 : index
    %c0_48 = arith.constant 0 : index
    %98 = vector.load %arg5[%c11_47, %c0_48] : memref<16x128xf32, #tpu.memory_space<vmem>>, vector<1x128xf32>
    tpu.vector_store %arg5[%c11_47, %c0_48], %97 {strides = array<i32>} : memref<16x128xf32, #tpu.memory_space<vmem>>, vector<1x128xf32>,
    %c12_i32 = arith.constant 12 : i32
    %99 = arith.addi %2, %c12_i32 : i32
    %100 = arith.index_cast %99 : i32 to index
    %101 = memref.load %arg2[%100] : memref<32xi32, #tpu.memory_space<smem>>
    %102 = arith.index_cast %101 : i32 to index
    %c0_49 = arith.constant 0 : index
    %103 = vector.load %arg3[%102, %c0_49] : memref<64x128xf32, #tpu.memory_space<vmem>>, vector<1x128xf32>
    %c12 = arith.constant 12 : index
    %c0_50 = arith.constant 0 : index
    %104 = vector.load %arg4[%c12, %c0_50] : memref<16x128xf32, #tpu.memory_space<vmem>>, vector<1x128xf32>
    %105 = arith.addf %103, %104 : vector<1x128xf32>
    %c12_51 = arith.constant 12 : index
    %c0_52 = arith.constant 0 : index
    %106 = vector.load %arg5[%c12_51, %c0_52] : memref<16x128xf32, #tpu.memory_space<vmem>>, vector<1x128xf32>
    tpu.vector_store %arg5[%c12_51, %c0_52], %105 {strides = array<i32>} : memref<16x128xf32, #tpu.memory_space<vmem>>, vector<1x128xf32>,
    %c13_i32 = arith.constant 13 : i32
    %107 = arith.addi %2, %c13_i32 : i32
    %108 = arith.index_cast %107 : i32 to index
    %109 = memref.load %arg2[%108] : memref<32xi32, #tpu.memory_space<smem>>
    %110 = arith.index_cast %109 : i32 to index
    %c0_53 = arith.constant 0 : index
    %111 = vector.load %arg3[%110, %c0_53] : memref<64x128xf32, #tpu.memory_space<vmem>>, vector<1x128xf32>
    %c13 = arith.constant 13 : index
    %c0_54 = arith.constant 0 : index
    %112 = vector.load %arg4[%c13, %c0_54] : memref<16x128xf32, #tpu.memory_space<vmem>>, vector<1x128xf32>
    %113 = arith.addf %111, %112 : vector<1x128xf32>
    %c13_55 = arith.constant 13 : index
    %c0_56 = arith.constant 0 : index
    %114 = vector.load %arg5[%c13_55, %c0_56] : memref<16x128xf32, #tpu.memory_space<vmem>>, vector<1x128xf32>
    tpu.vector_store %arg5[%c13_55, %c0_56], %113 {strides = array<i32>} : memref<16x128xf32, #tpu.memory_space<vmem>>, vector<1x128xf32>,
    %c14_i32 = arith.constant 14 : i32
    %115 = arith.addi %2, %c14_i32 : i32
    %116 = arith.index_cast %115 : i32 to index
    %117 = memref.load %arg2[%116] : memref<32xi32, #tpu.memory_space<smem>>
    %118 = arith.index_cast %117 : i32 to index
    %c0_57 = arith.constant 0 : index
    %119 = vector.load %arg3[%118, %c0_57] : memref<64x128xf32, #tpu.memory_space<vmem>>, vector<1x128xf32>
    %c14 = arith.constant 14 : index
    %c0_58 = arith.constant 0 : index
    %120 = vector.load %arg4[%c14, %c0_58] : memref<16x128xf32, #tpu.memory_space<vmem>>, vector<1x128xf32>
    %121 = arith.addf %119, %120 : vector<1x128xf32>
    %c14_59 = arith.constant 14 : index
    %c0_60 = arith.constant 0 : index
    %122 = vector.load %arg5[%c14_59, %c0_60] : memref<16x128xf32, #tpu.memory_space<vmem>>, vector<1x128xf32>
    tpu.vector_store %arg5[%c14_59, %c0_60], %121 {strides = array<i32>} : memref<16x128xf32, #tpu.memory_space<vmem>>, vector<1x128xf32>,
    %c15_i32 = arith.constant 15 : i32
    %123 = arith.addi %2, %c15_i32 : i32
    %124 = arith.index_cast %123 : i32 to index
    %125 = memref.load %arg2[%124] : memref<32xi32, #tpu.memory_space<smem>>
    %126 = arith.index_cast %125 : i32 to index
    %c0_61 = arith.constant 0 : index
    %127 = vector.load %arg3[%126, %c0_61] : memref<64x128xf32, #tpu.memory_space<vmem>>, vector<1x128xf32>
    %c15 = arith.constant 15 : index
    %c0_62 = arith.constant 0 : index
    %128 = vector.load %arg4[%c15, %c0_62] : memref<16x128xf32, #tpu.memory_space<vmem>>, vector<1x128xf32>
    %129 = arith.addf %127, %128 : vector<1x128xf32>
    %c15_63 = arith.constant 15 : index
    %c0_64 = arith.constant 0 : index
    %130 = vector.load %arg5[%c15_63, %c0_64] : memref<16x128xf32, #tpu.memory_space<vmem>>, vector<1x128xf32>
    tpu.vector_store %arg5[%c15_63, %c0_64], %129 {strides = array<i32>} : memref<16x128xf32, #tpu.memory_space<vmem>>, vector<1x128xf32>,
    return
  }
  func.func @transform_0(%arg0: i32, %arg1: i32, %arg2: memref<32xi32, #tpu.memory_space<smem>>) -> (i32, i32) {
    %c0_i32 = arith.constant 0 : i32
    %c0_i32_0 = arith.constant 0 : i32
    %c0_i32_1 = arith.constant 0 : i32
    return %c0_i32, %c0_i32_0 : i32, i32
  }
  func.func @transform_1(%arg0: i32, %arg1: i32, %arg2: memref<32xi32, #tpu.memory_space<smem>>) -> (i32, i32) {
    %c0_i32 = arith.constant 0 : i32
    %c0_i32_0 = arith.constant 0 : i32
    return %arg0, %c0_i32 : i32, i32
  }
  func.func @transform_2(%arg0: i32, %arg1: i32, %arg2: memref<32xi32, #tpu.memory_space<smem>>) -> (i32, i32) {
    %c1_i32 = arith.constant 1 : i32
    %0 = arith.muli %arg1, %c1_i32 : i32
    %1 = arith.addi %0, %arg0 : i32
    %c0_i32 = arith.constant 0 : i32
    %c0_i32_0 = arith.constant 0 : i32
    return %1, %c0_i32 : i32, i32
  }
}

</mosaic_0001>

<llo_original>
// kernel: tpu_custom_call.1
$region0: #{tpu_custom_call.1}
  #allocation0 [shape = 'u32[]', space=smem, size = 0x4, offset = 0x4, fixed_abs, tag = 'smem constant byte address 0x4 - core index']
  #allocation1 [shape = 'u32[144,128]{1,0:T(1,128)}', space=vmem, size = 0x12000, scoped, tag = 'internal scratch']
  #allocation2 [shape = 's32[1]{0}', space=sflag, size = 0x4, scoped, tag = 'scoped memory for tpu_custom_call.1']
  #allocation3 [shape = 'u8[512]{0}', space=smem, size = 0x200, scoped, tag = 'prefetched SMEM operand 0']
  %s0 = inlined_call_operand.hbm [shape: s32[32], index: 0, kind: input, shape index: {}]
  %s1 = inlined_call_operand.hbm [shape: f32[64,128], index: 1, kind: input, shape index: {}]
  %s2 = inlined_call_operand.hbm [shape: f32[16,128], index: 2, kind: input, shape index: {}]
  %s3 = inlined_call_operand.hbm [shape: f32[32,128], index: 3, kind: output, shape index: {}]
  %s4 = sld [smem:[#allocation0]]
  $region49: #{tpu_custom_call.1} parent=0
    _
  %s6 = ssub.s32 1, %s4
  %s7 = scalar_select 0, %s6, %s4
  %9 = dma.hbm_to_smem %s0, 16, [#allocation3], [#allocation2]
  %10 = dma.done [#allocation2], 16
  %11 = sfence
  $region1: #{tpu_custom_call.1} parent=0
    #allocation4 [shape = 'u8[32768]{0}', space=vmem, size = 0x8000, scoped, tag = 'input window, operand 1, single buffered']
    #allocation5 [shape = 's32[2]{0}', space=sflag, size = 0x8, scoped, tag = 'scoped memory for tpu_custom_call.1']
    #allocation6 [shape = 's32[2]{0}', space=sflag, size = 0x8, scoped, tag = 'scoped memory for tpu_custom_call.1']
    #allocation7 [shape = 'u8[8192]{0}', space=vmem, size = 0x2000, scoped, tag = 'input window, operand 2, single buffered']
    #allocation8 [shape = 's32[1]{0}', space=sflag, size = 0x4, scoped, tag = 'scoped memory for tpu_custom_call.1']
    #allocation9 [shape = 'u8[16384]{0}', space=vmem, size = 0x4000, scoped, tag = 'output window, operand 0']
    %12 = vsyncpa [#allocation5], 0
    %13 = vsyncpa [#allocation8], 0
    %14 = vsyncpa [#allocation6], 0
    %s15 = scalar_lea.sflag [#allocation6], 1
    %16 = vsyncpa %s15, 0
    loop: start=0, step=1, limit=4
    $region2: #{tpu_custom_call.1} parent=1 // loop_pre_header
      _
    $region3: #{tpu_custom_call.1} parent=1 // loop_header
      %s18 = sphi 0, %s22
      %p19 = scmp.ge.s32.totalorder %s18, 4
      %s25 = sphi 0, %s37
      %s26 = sphi 0, %s33
      %s27 = sphi 0, %s25
      %s28 = sphi 0, %s26
      %s29 = sphi 0, %s27
      %s30 = sphi 0, %s28
      %s38 = sphi 0, %s38
      %s40 = sphi 0, %s38
      %s41 = sphi 0, %s40
      %s55 = sphi 0, %s41
      %s61 = sphi 0, %s63
      %s64 = sphi 0, %s61
      %s65 = sphi 0, %s64
      %s81 = sphi 0, %s65
      %s89 = sphi 0, %s91
      %s92 = sphi 0, %s89
      %s93 = sphi 0, %s92
      %s109 = sphi 0, %s93
    $region4: #{tpu_custom_call.1} parent=1 // loop_header_branch
      %21 = sbr.rel (%p19) target = $region8
    $region5: #{tpu_custom_call.1} parent=1 // loop_body
      %s23 = ssub.s32 %s18, 1
      %s24 = ssub.s32 %s18, 2
      %s31 = sadd.s32 1, %s26
      %p32 = scmp.ge.s32.totalorder %s31, 2
      %s33 = scalar_select %p32, 0, %s31
      %s34 = sadd.s32 1, %s25
      %s35 = scalar_select %p32, %s34, %s25
      %p36 = scmp.ge.s32.totalorder %s35, 1
      %s37 = scalar_select %p36, 0, %s35
      %s39 = sadd.s32 %s38, 1
      %p42 = scmp.eq.s32.totalorder %s18, 1
      %p43 = scmp.ne.s32.totalorder %s38, %s40
      %p44 = scmp.eq.s32.totalorder %s18, 0
      %p45 = por %p43, %p44
      %p46 = scmp.ne.s32.totalorder %s38, %s40
      %p47 = scmp.eq.s32.totalorder %s23, 1
      %p48 = por %p46, %p47
      %p49 = scmp.ne.s32.totalorder %s40, %s41
      %p50 = scmp.eq.s32.totalorder %s23, 0
      %p51 = por %p49, %p50
      %p52 = scmp.ne.s32.totalorder %s40, %s41
      %p53 = scmp.eq.s32.totalorder %s24, 1
      %p54 = por %p52, %p53
      %p56 = scmp.ne.s32.totalorder %s41, %s55
      %p57 = scmp.eq.s32.totalorder %s24, 0
      %p58 = por %p56, %p57
      %s59 = ssub.s32 %s25, %s37
      %p60 = scmp.eq.s32.totalorder %s59, 0
      %s62 = sadd.s32 %s61, 1
      %s63 = scalar_select %p60, %s61, %s62
      %p66 = pneg %p60
      %p67 = scmp.eq.s32.totalorder %s18, 1
      %p68 = por %p66, %p67
      %p69 = scmp.ne.s32.totalorder %s61, %s64
      %p70 = scmp.eq.s32.totalorder %s18, 0
      %p71 = por %p69, %p70
      %p72 = scmp.ne.s32.totalorder %s61, %s64
      %p73 = scmp.eq.s32.totalorder %s23, 1
      %p74 = por %p72, %p73
      %p75 = scmp.ne.s32.totalorder %s64, %s65
      %p76 = scmp.eq.s32.totalorder %s23, 0
      %p77 = por %p75, %p76
      %p78 = scmp.ne.s32.totalorder %s64, %s65
      %p79 = scmp.eq.s32.totalorder %s24, 1
      %p80 = por %p78, %p79
      %p82 = scmp.ne.s32.totalorder %s65, %s81
      %p83 = scmp.eq.s32.totalorder %s24, 0
      %p84 = por %p82, %p83
      %s85 = sadd.s32 %s26, %s25
      %s86 = sadd.s32 %s33, %s37
      %s87 = ssub.s32 %s85, %s86
      %p88 = scmp.eq.s32.totalorder %s87, 0
      %s90 = sadd.s32 %s89, 1
      %s91 = scalar_select %p88, %s89, %s90
      %p94 = pneg %p88
      %p95 = scmp.eq.s32.totalorder %s18, 1
      %p96 = por %p94, %p95
      %p97 = scmp.ne.s32.totalorder %s89, %s92
      %p98 = scmp.eq.s32.totalorder %s18, 0
      %p99 = por %p97, %p98
      %p100 = scmp.ne.s32.totalorder %s89, %s92
      %p101 = scmp.eq.s32.totalorder %s23, 1
      %p102 = por %p100, %p101
      %p103 = scmp.ne.s32.totalorder %s92, %s93
      %p104 = scmp.eq.s32.totalorder %s23, 0
      %p105 = por %p103, %p104
      %p106 = scmp.ne.s32.totalorder %s92, %s93
      %p107 = scmp.eq.s32.totalorder %s24, 1
      %p108 = por %p106, %p107
      %p110 = scmp.ne.s32.totalorder %s93, %s109
      %p111 = scmp.eq.s32.totalorder %s24, 0
      %p112 = por %p110, %p111
      %p113 = scmp.le.s32.totalorder 1, %s18
      %p114 = scmp.lt.s32.totalorder %s18, 3
      %p115 = pnand %p113, %p114
      %p116 = pneg %p115
      // Predicated region
      $region9: #{tpu_custom_call.1} parent=5 // pred_check
        _
      $region10: #{tpu_custom_call.1} parent=5 // pred_check_branch
        %118 = sbr.rel (%p115) target = $region12
      $region11: #{tpu_custom_call.1} parent=5 // pred_region
        %s119 = ssub.s32 %s18, 1
        // Predicated region
        $region13: #{tpu_custom_call.1} parent=11 // pred_check
          %p120 = pneg %p51
        $region14: #{tpu_custom_call.1} parent=11 // pred_check_branch
          %122 = sbr.rel (%p120) target = $region16
        $region15: #{tpu_custom_call.1} parent=11 // pred_region
          %s124 = ssub.s32 1024, 1024
          %125 = vsyncadd [#allocation5], %s124
          %s126 = sshll.u32 [#allocation4], 4
          %s127 = int_to_ptr.vmem [resolvable:$true] %s126
          %132 = dma.hbm_to_vmem [thread:$0]  %s1, 1024, %s127, [#allocation5], 128, 128, 8
        $region16: #{tpu_custom_call.1} parent=11 // pred_fallthru
          _
        // Predicated region
        $region17: #{tpu_custom_call.1} parent=11 // pred_check
          %p133 = pneg %p77
        $region18: #{tpu_custom_call.1} parent=11 // pred_check_branch
          %135 = sbr.rel (%p133) target = $region20
        $region19: #{tpu_custom_call.1} parent=11 // pred_region
          %s136 = smul.u32 2, %s27
          %s138 = ssub.s32 256, 256
          %139 = vsyncadd [#allocation8], %s138
          %s140 = smul.addr %s136, 128
          %s141 = scalar_lea.hbm %s2, %s140
          %s142 = sshll.u32 [#allocation7], 4
          %s143 = int_to_ptr.vmem [resolvable:$true] %s142
          %148 = dma.hbm_to_vmem [thread:$0]  %s141, 256, %s143, [#allocation8], 128, 128, 8
        $region20: #{tpu_custom_call.1} parent=11 // pred_fallthru
          _
      $region12: #{tpu_custom_call.1} parent=5 // pred_fallthru
        _
      %p149 = scmp.lt.s32.totalorder %s18, 2
      // Predicated region
      $region21: #{tpu_custom_call.1} parent=5 // pred_check
        %p150 = pneg %p149
      $region22: #{tpu_custom_call.1} parent=5 // pred_check_branch
        %152 = sbr.rel (%p150) target = $region24
      $region23: #{tpu_custom_call.1} parent=5 // pred_region
        _
      $region24: #{tpu_custom_call.1} parent=5 // pred_fallthru
        _
      %p153 = scmp.le.s32.totalorder 1, %s18
      %p154 = scmp.lt.s32.totalorder %s18, 3
      %p155 = pnand %p153, %p154
      %p156 = pneg %p155
      // Predicated region
      $region25: #{tpu_custom_call.1} parent=5 // pred_check
        _
      $region26: #{tpu_custom_call.1} parent=5 // pred_check_branch
        %158 = sbr.rel (%p155) target = $region28
      $region27: #{tpu_custom_call.1} parent=5 // pred_region
        %s159 = ssub.s32 %s18, 1
        // Predicated region
        $region29: #{tpu_custom_call.1} parent=27 // pred_check
          %p160 = pneg %p51
        $region30: #{tpu_custom_call.1} parent=27 // pred_check_branch
          %162 = sbr.rel (%p160) target = $region32
        $region31: #{tpu_custom_call.1} parent=27 // pred_region
          %163 = dma.done [#allocation5], 1024
        $region32: #{tpu_custom_call.1} parent=27 // pred_fallthru
          _
        // Predicated region
        $region33: #{tpu_custom_call.1} parent=27 // pred_check
          %p164 = pneg %p77
        $region34: #{tpu_custom_call.1} parent=27 // pred_check_branch
          %166 = sbr.rel (%p164) target = $region36
        $region35: #{tpu_custom_call.1} parent=27 // pred_region
          %167 = dma.done [#allocation8], 256
        $region36: #{tpu_custom_call.1} parent=27 // pred_fallthru
          _
        %p168 = pneg %p51
        %p169 = pneg %p48
        %p170 = pneg %p77
        %p171 = pneg %p74
        %p172 = pneg %p105
        %p173 = pneg %p102
        %s174 = sand.u32 %s92, 1
        %s175 = scalar_lea.sflag [#allocation6], %s174
        %s176 = sand.u32 %s92, 1
        %s177 = smul.addr %s176, 16
        %s178 = scalar_lea.vmem [#allocation9], %s177
        %s179 = smul.u32 2, %s27
        %s180 = sadd.s32 %s28, %s27
        %s181 = smul.u32 2, %s180
        %s182 = smul.u32 %s28, 16
        %s183 = smul.u32 %s27, 16
        %s184 = sadd.s32 %s182, %s183
        %s185 = sld [smem:[#allocation3 + %s184]]
        %s186 = scalar_lea.vmem [#allocation4], %s185
        %v187 = vld [vmem:[%s186] sm:$0x1]
        %v188 = vld [vmem:[#allocation7] sm:$0x1]
        %v189 = vadd.f32 %v187, %v188
        %190 = vst [vmem:[%s178] sm:$0x1] %v189
        %s191 = sadd.s32 %s184, 1
        %s192 = sld [smem:[#allocation3 + %s191]]
        %s193 = scalar_lea.vmem [#allocation4], %s192
        %v194 = vld [vmem:[%s193] sm:$0x1]
        %v195 = vld [vmem:[#allocation7 + $0x1] sm:$0x1]
        %v196 = vadd.f32 %v194, %v195
        %197 = vst [vmem:[%s178 + $0x1] sm:$0x1] %v196
        %s198 = sadd.s32 %s184, 2
        %s199 = sld [smem:[#allocation3 + %s198]]
        %s200 = scalar_lea.vmem [#allocation4], %s199
        %v201 = vld [vmem:[%s200] sm:$0x1]
        %v202 = vld [vmem:[#allocation7 + $0x2] sm:$0x1]
        %v203 = vadd.f32 %v201, %v202
        %204 = vst [vmem:[%s178 + $0x2] sm:$0x1] %v203
        %s205 = sadd.s32 %s184, 3
        %s206 = sld [smem:[#allocation3 + %s205]]
        %s207 = scalar_lea.vmem [#allocation4], %s206
        %v208 = vld [vmem:[%s207] sm:$0x1]
        %v209 = vld [vmem:[#allocation7 + $0x3] sm:$0x1]
        %v210 = vadd.f32 %v208, %v209
        %211 = vst [vmem:[%s178 + $0x3] sm:$0x1] %v210
        %s212 = sadd.s32 %s184, 4
        %s213 = sld [smem:[#allocation3 + %s212]]
        %s214 = scalar_lea.vmem [#allocation4], %s213
        %v215 = vld [vmem:[%s214] sm:$0x1]
        %v216 = vld [vmem:[#allocation7 + $0x4] sm:$0x1]
        %v217 = vadd.f32 %v215, %v216
        %218 = vst [vmem:[%s178 + $0x4] sm:$0x1] %v217
        %s219 = sadd.s32 %s184, 5
        %s220 = sld [smem:[#allocation3 + %s219]]
        %s221 = scalar_lea.vmem [#allocation4], %s220
        %v222 = vld [vmem:[%s221] sm:$0x1]
        %v223 = vld [vmem:[#allocation7 + $0x5] sm:$0x1]
        %v224 = vadd.f32 %v222, %v223
        %225 = vst [vmem:[%s178 + $0x5] sm:$0x1] %v224
        %s226 = sadd.s32 %s184, 6
        %s227 = sld [smem:[#allocation3 + %s226]]
        %s228 = scalar_lea.vmem [#allocation4], %s227
        %v229 = vld [vmem:[%s228] sm:$0x1]
        %v230 = vld [vmem:[#allocation7 + $0x6] sm:$0x1]
        %v231 = vadd.f32 %v229, %v230
        %232 = vst [vmem:[%s178 + $0x6] sm:$0x1] %v231
        %s233 = sadd.s32 %s184, 7
        %s234 = sld [smem:[#allocation3 + %s233]]
        %s235 = scalar_lea.vmem [#allocation4], %s234
        %v236 = vld [vmem:[%s235] sm:$0x1]
        %v237 = vld [vmem:[#allocation7 + $0x7] sm:$0x1]
        %v238 = vadd.f32 %v236, %v237
        %239 = vst [vmem:[%s178 + $0x7] sm:$0x1] %v238
        %s240 = sadd.s32 %s184, 8
        %s241 = sld [smem:[#allocation3 + %s240]]
        %s242 = scalar_lea.vmem [#allocation4], %s241
        %v243 = vld [vmem:[%s242] sm:$0x1]
        %v244 = vld [vmem:[#allocation7 + $0x8] sm:$0x1]
        %v245 = vadd.f32 %v243, %v244
        %246 = vst [vmem:[%s178 + $0x8] sm:$0x1] %v245
        %s247 = sadd.s32 %s184, 9
        %s248 = sld [smem:[#allocation3 + %s247]]
        %s249 = scalar_lea.vmem [#allocation4], %s248
        %v250 = vld [vmem:[%s249] sm:$0x1]
        %v251 = vld [vmem:[#allocation7 + $0x9] sm:$0x1]
        %v252 = vadd.f32 %v250, %v251
        %253 = vst [vmem:[%s178 + $0x9] sm:$0x1] %v252
        %s254 = sadd.s32 %s184, 10
        %s255 = sld [smem:[#allocation3 + %s254]]
        %s256 = scalar_lea.vmem [#allocation4], %s255
        %v257 = vld [vmem:[%s256] sm:$0x1]
        %v258 = vld [vmem:[#allocation7 + $0xa] sm:$0x1]
        %v259 = vadd.f32 %v257, %v258
        %260 = vst [vmem:[%s178 + $0xa] sm:$0x1] %v259
        %s261 = sadd.s32 %s184, 11
        %s262 = sld [smem:[#allocation3 + %s261]]
        %s263 = scalar_lea.vmem [#allocation4], %s262
        %v264 = vld [vmem:[%s263] sm:$0x1]
        %v265 = vld [vmem:[#allocation7 + $0xb] sm:$0x1]
        %v266 = vadd.f32 %v264, %v265
        %267 = vst [vmem:[%s178 + $0xb] sm:$0x1] %v266
        %s268 = sadd.s32 %s184, 12
        %s269 = sld [smem:[#allocation3 + %s268]]
        %s270 = scalar_lea.vmem [#allocation4], %s269
        %v271 = vld [vmem:[%s270] sm:$0x1]
        %v272 = vld [vmem:[#allocation7 + $0xc] sm:$0x1]
        %v273 = vadd.f32 %v271, %v272
        %274 = vst [vmem:[%s178 + $0xc] sm:$0x1] %v273
        %s275 = sadd.s32 %s184, 13
        %s276 = sld [smem:[#allocation3 + %s275]]
        %s277 = scalar_lea.vmem [#allocation4], %s276
        %v278 = vld [vmem:[%s277] sm:$0x1]
        %v279 = vld [vmem:[#allocation7 + $0xd] sm:$0x1]
        %v280 = vadd.f32 %v278, %v279
        %281 = vst [vmem:[%s178 + $0xd] sm:$0x1] %v280
        %s282 = sadd.s32 %s184, 14
        %s283 = sld [smem:[#allocation3 + %s282]]
        %s284 = scalar_lea.vmem [#allocation4], %s283
        %v285 = vld [vmem:[%s284] sm:$0x1]
        %v286 = vld [vmem:[#allocation7 + $0xe] sm:$0x1]
        %v287 = vadd.f32 %v285, %v286
        %288 = vst [vmem:[%s178 + $0xe] sm:$0x1] %v287
        %s289 = sadd.s32 %s184, 15
        %s290 = sld [smem:[#allocation3 + %s289]]
        %s291 = scalar_lea.vmem [#allocation4], %s290
        %v292 = vld [vmem:[%s291] sm:$0x1]
        %v293 = vld [vmem:[#allocation7 + $0xf] sm:$0x1]
        %v294 = vadd.f32 %v292, %v293
        %295 = vst [vmem:[%s178 + $0xf] sm:$0x1] %v294
        %s296 = sand.u32 %s92, 1
        %s297 = scalar_lea.sflag [#allocation6], %s296
        %s298 = sand.u32 %s92, 1
        %s299 = smul.addr %s298, 16
        %s300 = scalar_lea.vmem [#allocation9], %s299
        // Predicated region
        $region37: #{tpu_custom_call.1} parent=27 // pred_check
          %p301 = pneg %p102
        $region38: #{tpu_custom_call.1} parent=27 // pred_check_branch
          %303 = sbr.rel (%p301) target = $region40
        $region39: #{tpu_custom_call.1} parent=27 // pred_region
          %s304 = sadd.s32 %s28, %s27
          %s305 = smul.u32 2, %s304
          %s307 = ssub.s32 256, 256
          %308 = vsyncadd %s297, %s307
          %s309 = smul.addr %s305, 128
          %s310 = scalar_lea.hbm %s3, %s309
          %s311 = sshll.u32 %s300, 4
          %s312 = int_to_ptr.vmem [resolvable:$true] %s311
          %317 = dma.vmem_to_hbm [thread:$0]  %s312, 256, %s310, %s297, 128, 128, 8
        $region40: #{tpu_custom_call.1} parent=27 // pred_fallthru
          _
      $region28: #{tpu_custom_call.1} parent=5 // pred_fallthru
        _
      %p318 = scmp.le.s32.totalorder 2, %s18
      // Predicated region
      $region41: #{tpu_custom_call.1} parent=5 // pred_check
        %p319 = pneg %p318
      $region42: #{tpu_custom_call.1} parent=5 // pred_check_branch
        %321 = sbr.rel (%p319) target = $region44
      $region43: #{tpu_custom_call.1} parent=5 // pred_region
        %s322 = ssub.s32 %s18, 2
        // Predicated region
        $region45: #{tpu_custom_call.1} parent=43 // pred_check
          %p323 = pneg %p108
        $region46: #{tpu_custom_call.1} parent=43 // pred_check_branch
          %325 = sbr.rel (%p323) target = $region48
        $region47: #{tpu_custom_call.1} parent=43 // pred_region
          %s326 = sand.u32 %s93, 1
          %s327 = scalar_lea.sflag [#allocation6], %s326
          %s328 = sand.u32 %s93, 1
          %s329 = smul.addr %s328, 16
          %s330 = scalar_lea.vmem [#allocation9], %s329
          %331 = dma.done %s327, 256
        $region48: #{tpu_custom_call.1} parent=43 // pred_fallthru
          _
      $region44: #{tpu_custom_call.1} parent=5 // pred_fallthru
        _
    $region6: #{tpu_custom_call.1} parent=1 // loop_footer
      %s22 = sadd.s32 1, %s18
    $region7: #{tpu_custom_call.1} parent=1 // loop_footer_branch
      %17 = sbr.rel target = $region3
    $region8: #{tpu_custom_call.1} parent=1 // loop_exit
      _
    %332 = vsyncpa [#allocation5], 1
    %s333 = scalar_lea.sflag [#allocation5], 1
    %334 = vsyncpa %s333, 1
    %335 = vsyncpa [#allocation8], 1
    %336 = vsyncpa [#allocation6], 1
    %s337 = scalar_lea.sflag [#allocation6], 1
    %338 = vsyncpa %s337, 1

</llo_original>
